<compile_context>
chip_gen: v6e
topology: v6e:2x2x1
jax: 0.10.0
libtpu: 0.0.40
codegen_flags: <defaults>
</compile_context>

<pallas_src>
import jax
import jax.numpy as jnp
from jax.experimental import pallas as pl
from jax.experimental.pallas import tpu as pltpu  # noqa: F401  (TPU backend)


def _leaky_relu(x, slope=0.01):
    return jnp.where(x >= 0, x, slope * x)


def critic_kernel(s_ref, a_ref,
                  w1_ref, b1_ref,
                  gamma_ref, beta_ref,
                  w2a_ref, w2x_ref, b2_ref,
                  w4_ref, b4_ref,
                  out_ref):
    states = s_ref[...]           # (B, state_size*2)
    actions = a_ref[...]          # (B, action_size*2)
    inv_b = jnp.float32(1.0 / states.shape[0])

    # ---- fcs1 + leaky_relu (MXU) ----
    xs = jnp.dot(states, w1_ref[...], preferred_element_type=jnp.float32) + b1_ref[...]
    xs = _leaky_relu(xs)

    # ---- BatchNorm1d, training mode ----
    # One-pass stats: var = E[x^2] - E[x]^2 (biased, matching torch training BN).
    mean = jnp.sum(xs, axis=0, keepdims=True) * inv_b            # (1, h1)
    mean_sq = jnp.sum(xs * xs, axis=0, keepdims=True) * inv_b    # (1, h1)
    var = mean_sq - mean * mean
    # Fold affine into one FMA: scale = gamma*rsqrt(var+eps), shift = beta - mean*scale.
    scale = gamma_ref[...] * jax.lax.rsqrt(var + 1e-5)           # rsqrt -> EUP slot
    shift = beta_ref[...] - mean * scale
    xs = xs * scale + shift

    # ---- fc2: cat((actions, xs), 1) @ W2 + b2, on split weights (MXU) ----
    h = (jnp.dot(xs, w2x_ref[...], preferred_element_type=jnp.float32)
         + jnp.dot(actions, w2a_ref[...], preferred_element_type=jnp.float32)
         + b2_ref[...])
    h = _leaky_relu(h)

    # ---- fc4 -> Q value (N=1): VPU multiply + lane reduce, no MXU ----
    # w4 is stored as a (1, h2) row: broadcast mul + axis-1 (lane) sum.
    q = jnp.sum(h * w4_ref[...], axis=1, keepdims=True) + b4_ref[...]
    out_ref[...] = q


def critic_forward(states, actions, params):
    (w1, b1, gamma, beta, w2a, w2x, b2, w4_row, b4) = params
    B = states.shape[0]

    inputs = (states, actions, w1, b1, gamma, beta, w2a, w2x, b2, w4_row, b4)

    def full_spec(x):
        # single grid point, full-array block resident in VMEM
        return pl.BlockSpec(x.shape, lambda: tuple(0 for _ in x.shape))

    out_shape = jax.ShapeDtypeStruct((B, 1), jnp.float32)

    return pl.pallas_call(
        critic_kernel,
        out_shape=out_shape,
        grid_spec=pl.GridSpec(
            grid=(),  # whole problem (< 64 KiB) is VMEM-resident; no tiling
            in_specs=[full_spec(x) for x in inputs],
            out_specs=pl.BlockSpec((B, 1), lambda: (0, 0)),
        ),
    )(*inputs)


def make_params(key, state_size, action_size, network_shape):
    """Deterministic init mimicking Critic.reset_parameters / nn defaults."""
    h1, h2 = network_shape
    in1 = state_size * 2
    in2 = h1 + action_size * 2
    ks = jax.random.split(key, 6)

    lim1 = 1.0 / jnp.sqrt(jnp.float32(h1))   # hidden_init uses weight.size()[0] = out_features
    lim2 = 1.0 / jnp.sqrt(jnp.float32(h2))

    # weights stored [in, out]
    w1 = jax.random.uniform(ks[0], (in1, h1), jnp.float32, -lim1, lim1)
    b1 = jax.random.uniform(ks[1], (1, h1), jnp.float32, -lim1, lim1)
    w2 = jax.random.uniform(ks[2], (in2, h2), jnp.float32, -lim2, lim2)
    b2 = jax.random.uniform(ks[3], (1, h2), jnp.float32, -lim2, lim2)
    w4_row = jax.random.uniform(ks[4], (1, h2), jnp.float32, -3e-3, 3e-3)  # fc4 weight as a row
    b4 = jax.random.uniform(ks[5], (1, 1), jnp.float32, -3e-3, 3e-3)

    gamma = jnp.ones((1, h1), jnp.float32)   # BatchNorm1d affine defaults
    beta = jnp.zeros((1, h1), jnp.float32)

    # split fc2 weight: concat order in forward is (actions, xs)
    a_dim = action_size * 2
    w2a = w2[:a_dim, :]
    w2x = w2[a_dim:, :]

    return (w1, b1, gamma, beta, w2a, w2x, b2, w4_row, b4)


def reference_forward(states, actions, params):
    """Pure-JAX reference matching the PyTorch module semantics."""
    (w1, b1, gamma, beta, w2a, w2x, b2, w4_row, b4) = params
    xs = _leaky_relu(states @ w1 + b1)
    mean = xs.mean(0, keepdims=True)
    var = ((xs - mean) ** 2).mean(0, keepdims=True)            # biased, training mode
    xs = (xs - mean) / jnp.sqrt(var + 1e-5) * gamma + beta
    h = _leaky_relu(actions @ w2a + xs @ w2x + b2)
    return h @ w4_row.T + b4


if __name__ == "__main__":
    state_size = 8
    action_size = 2
    network_shape = (32, 32)
    batch = 8

    key = jax.random.PRNGKey(0)
    k_s, k_a, k_p = jax.random.split(key, 3)

    # forward takes "states" of size state_size*2 and "actions" of action_size*2
    states = jax.random.normal(k_s, (batch, state_size * 2), jnp.float32)
    actions = jax.random.normal(k_a, (batch, action_size * 2), jnp.float32)
    params = make_params(k_p, state_size, action_size, network_shape)

    q = critic_forward(states, actions, params)
    q = jax.block_until_ready(q)

    q_ref = reference_forward(states, actions, params)
    assert q.shape == (batch, 1)
    # one-pass BN stats (E[x^2]-E[x]^2) vs two-pass reference: allow tiny f32 slack
    assert jnp.allclose(q, q_ref, atol=1e-4, rtol=1e-4), (q, q_ref)

    print("KERNEL_OK")
</pallas_src>

<mosaic_0001>
module attributes {stable_mosaic.version = 11 : i64} {
  func.func @critic_kernel(%arg0: memref<8x16xf32, #tpu.memory_space<vmem>>, %arg1: memref<8x4xf32, #tpu.memory_space<vmem>>, %arg2: memref<16x32xf32, #tpu.memory_space<vmem>>, %arg3: memref<1x32xf32, #tpu.memory_space<vmem>>, %arg4: memref<1x32xf32, #tpu.memory_space<vmem>>, %arg5: memref<1x32xf32, #tpu.memory_space<vmem>>, %arg6: memref<4x32xf32, #tpu.memory_space<vmem>>, %arg7: memref<32x32xf32, #tpu.memory_space<vmem>>, %arg8: memref<1x32xf32, #tpu.memory_space<vmem>>, %arg9: memref<1x32xf32, #tpu.memory_space<vmem>>, %arg10: memref<1x1xf32, #tpu.memory_space<vmem>>, %arg11: memref<8x1xf32, #tpu.memory_space<vmem>>) attributes {dimension_semantics = [], scalar_prefetch = 0 : i64, scratch_operands = 0 : i64, tpu.core_type = #tpu.core_type<tc>} {
    %c0 = arith.constant 0 : index
    %c0_0 = arith.constant 0 : index
    %0 = vector.load %arg0[%c0, %c0_0] : memref<8x16xf32, #tpu.memory_space<vmem>>, vector<8x16xf32>
    %c0_1 = arith.constant 0 : index
    %c0_2 = arith.constant 0 : index
    %1 = vector.load %arg1[%c0_1, %c0_2] : memref<8x4xf32, #tpu.memory_space<vmem>>, vector<8x4xf32>
    %c0_3 = arith.constant 0 : index
    %c0_4 = arith.constant 0 : index
    %2 = vector.load %arg2[%c0_3, %c0_4] : memref<16x32xf32, #tpu.memory_space<vmem>>, vector<16x32xf32>
    %cst = arith.constant dense<0.000000e+00> : vector<8x32xf32>
    %3 = tpu.matmul %0, %2, %cst {dimension_numbers = #tpu.dot_dimension_numbers<[1], [0], [0], [1], [0, 0, 1, 1], [], []>} : vector<8x16xf32>, vector<16x32xf32>, vector<8x32xf32> -> vector<8x32xf32>
    %c0_5 = arith.constant 0 : index
    %c0_6 = arith.constant 0 : index
    %4 = vector.load %arg3[%c0_5, %c0_6] : memref<1x32xf32, #tpu.memory_space<vmem>>, vector<1x32xf32>
    %5 = vector.broadcast %4 : vector<1x32xf32> to vector<8x32xf32>
    %6 = arith.addf %3, %5 : vector<8x32xf32>
    %cst_7 = arith.constant 0.000000e+00 : f32
    %7 = vector.broadcast %cst_7 : f32 to vector<8x32xf32>
    %8 = arith.cmpf oge, %6, %7 : vector<8x32xf32>
    %cst_8 = arith.constant 0.00999999977 : f32
    %9 = vector.broadcast %cst_8 : f32 to vector<8x32xf32>
    %10 = arith.mulf %9, %6 : vector<8x32xf32>
    %11 = arith.select %8, %6, %10 : vector<8x32xi1>, vector<8x32xf32>
    %cst_9 = arith.constant dense<0.000000e+00> : vector<32xf32>
    %12 = vector.multi_reduction <add>, %11, %cst_9 [0] : vector<8x32xf32> to vector<32xf32>
    %13 = vector.shape_cast %12 : vector<32xf32> to vector<1x32xf32>
    %cst_10 = arith.constant 1.250000e-01 : f32
    %14 = vector.broadcast %cst_10 : f32 to vector<1x32xf32>
    %15 = arith.mulf %13, %14 : vector<1x32xf32>
    %16 = arith.mulf %11, %11 : vector<8x32xf32>
    %cst_11 = arith.constant dense<0.000000e+00> : vector<32xf32>
    %17 = vector.multi_reduction <add>, %16, %cst_11 [0] : vector<8x32xf32> to vector<32xf32>
    %18 = vector.shape_cast %17 : vector<32xf32> to vector<1x32xf32>
    %cst_12 = arith.constant 1.250000e-01 : f32
    %19 = vector.broadcast %cst_12 : f32 to vector<1x32xf32>
    %20 = arith.mulf %18, %19 : vector<1x32xf32>
    %21 = arith.mulf %15, %15 : vector<1x32xf32>
    %22 = arith.subf %20, %21 : vector<1x32xf32>
    %c0_13 = arith.constant 0 : index
    %c0_14 = arith.constant 0 : index
    %23 = vector.load %arg4[%c0_13, %c0_14] : memref<1x32xf32, #tpu.memory_space<vmem>>, vector<1x32xf32>
    %cst_15 = arith.constant 9.99999974E-6 : f32
    %24 = vector.broadcast %cst_15 : f32 to vector<1x32xf32>
    %25 = arith.addf %22, %24 : vector<1x32xf32>
    %26 = math.rsqrt %25 : vector<1x32xf32>
    %27 = arith.mulf %23, %26 : vector<1x32xf32>
    %c0_16 = arith.constant 0 : index
    %c0_17 = arith.constant 0 : index
    %28 = vector.load %arg5[%c0_16, %c0_17] : memref<1x32xf32, #tpu.memory_space<vmem>>, vector<1x32xf32>
    %29 = arith.mulf %15, %27 : vector<1x32xf32>
    %30 = arith.subf %28, %29 : vector<1x32xf32>
    %31 = vector.broadcast %27 : vector<1x32xf32> to vector<8x32xf32>
    %32 = arith.mulf %11, %31 : vector<8x32xf32>
    %33 = vector.broadcast %30 : vector<1x32xf32> to vector<8x32xf32>
    %34 = arith.addf %32, %33 : vector<8x32xf32>
    %c0_18 = arith.constant 0 : index
    %c0_19 = arith.constant 0 : index
    %35 = vector.load %arg7[%c0_18, %c0_19] : memref<32x32xf32, #tpu.memory_space<vmem>>, vector<32x32xf32>
    %cst_20 = arith.constant dense<0.000000e+00> : vector<8x32xf32>
    %36 = tpu.matmul %34, %35, %cst_20 {dimension_numbers = #tpu.dot_dimension_numbers<[1], [0], [0], [1], [0, 0, 1, 1], [], []>} : vector<8x32xf32>, vector<32x32xf32>, vector<8x32xf32> -> vector<8x32xf32>
    %c0_21 = arith.constant 0 : index
    %c0_22 = arith.constant 0 : index
    %37 = vector.load %arg6[%c0_21, %c0_22] : memref<4x32xf32, #tpu.memory_space<vmem>>, vector<4x32xf32>
    %cst_23 = arith.constant dense<0.000000e+00> : vector<8x32xf32>
    %38 = tpu.matmul %1, %37, %cst_23 {dimension_numbers = #tpu.dot_dimension_numbers<[1], [0], [0], [1], [0, 0, 1, 1], [], []>} : vector<8x4xf32>, vector<4x32xf32>, vector<8x32xf32> -> vector<8x32xf32>
    %39 = arith.addf %36, %38 : vector<8x32xf32>
    %c0_24 = arith.constant 0 : index
    %c0_25 = arith.constant 0 : index
    %40 = vector.load %arg8[%c0_24, %c0_25] : memref<1x32xf32, #tpu.memory_space<vmem>>, vector<1x32xf32>
    %41 = vector.broadcast %40 : vector<1x32xf32> to vector<8x32xf32>
    %42 = arith.addf %39, %41 : vector<8x32xf32>
    %cst_26 = arith.constant 0.000000e+00 : f32
    %43 = vector.broadcast %cst_26 : f32 to vector<8x32xf32>
    %44 = arith.cmpf oge, %42, %43 : vector<8x32xf32>
    %cst_27 = arith.constant 0.00999999977 : f32
    %45 = vector.broadcast %cst_27 : f32 to vector<8x32xf32>
    %46 = arith.mulf %45, %42 : vector<8x32xf32>
    %47 = arith.select %44, %42, %46 : vector<8x32xi1>, vector<8x32xf32>
    %c0_28 = arith.constant 0 : index
    %c0_29 = arith.constant 0 : index
    %48 = vector.load %arg9[%c0_28, %c0_29] : memref<1x32xf32, #tpu.memory_space<vmem>>, vector<1x32xf32>
    %49 = vector.broadcast %48 : vector<1x32xf32> to vector<8x32xf32>
    %50 = arith.mulf %47, %49 : vector<8x32xf32>
    %cst_30 = arith.constant dense<0.000000e+00> : vector<8xf32>
    %51 = vector.multi_reduction <add>, %50, %cst_30 [1] : vector<8x32xf32> to vector<8xf32>
    %52 = vector.shape_cast %51 : vector<8xf32> to vector<8x1xf32>
    %c0_31 = arith.constant 0 : index
    %c0_32 = arith.constant 0 : index
    %53 = vector.load %arg10[%c0_31, %c0_32] : memref<1x1xf32, #tpu.memory_space<vmem>>, vector<1x1xf32>
    %54 = vector.broadcast %53 : vector<1x1xf32> to vector<8x1xf32>
    %55 = arith.addf %52, %54 : vector<8x1xf32>
    %c0_33 = arith.constant 0 : index
    %c0_34 = arith.constant 0 : index
    %56 = vector.load %arg11[%c0_33, %c0_34] : memref<8x1xf32, #tpu.memory_space<vmem>>, vector<8x1xf32>
    tpu.vector_store %arg11[%c0_33, %c0_34], %55 {strides = array<i32>} : memref<8x1xf32, #tpu.memory_space<vmem>>, vector<8x1xf32>,
    return
  }
}

</mosaic_0001>

<llo_original>
// kernel: tpu_custom_call.1
$region0: #{tpu_custom_call.1}
  #allocation0 [shape = 'u32[]', space=smem, size = 0x4, offset = 0x4, fixed_abs, tag = 'smem constant byte address 0x4 - core index']
  #allocation1 [shape = 'u32[144,128]{1,0:T(1,128)}', space=vmem, size = 0x12000, scoped, tag = 'internal scratch']
  #allocation2 [shape = 'f32[1,1]{1,0:T(1,128)S(1)}', space=vmem, size = 0x200, scoped, tag = 'scoped memory for tpu_custom_call.1']
  %s0 = inlined_call_operand.hbm [shape: f32[8,16], index: 0, kind: input, shape index: {}]
  %s1 = inlined_call_operand.vmem [shape: f32[8,4], index: 1, kind: input, shape index: {}]
  %s2 = inlined_call_operand.vmem [shape: f32[16,32], index: 2, kind: input, shape index: {}]
  %s3 = inlined_call_operand.vmem [shape: f32[1,32], index: 3, kind: input, shape index: {}]
  %s4 = inlined_call_operand.hbm [shape: f32[1,32], index: 4, kind: input, shape index: {}]
  %s5 = inlined_call_operand.vmem [shape: f32[1,32], index: 5, kind: input, shape index: {}]
  %s6 = inlined_call_operand.vmem [shape: f32[4,32], index: 6, kind: input, shape index: {}]
  %s7 = inlined_call_operand.hbm [shape: f32[32,32], index: 7, kind: input, shape index: {}]
  %s8 = inlined_call_operand.vmem [shape: f32[1,32], index: 8, kind: input, shape index: {}]
  %s9 = inlined_call_operand.vmem [shape: f32[1,32], index: 9, kind: input, shape index: {}]
  %s10 = inlined_call_operand.<no memory space> [shape: f32[1,1], index: 10, kind: input, shape index: {}]
  %s11 = inlined_call_operand.vmem [shape: f32[8,1], index: 11, kind: output, shape index: {}]
  %s12 = sld [smem:[#allocation0]]
  $region66: #{tpu_custom_call.1} parent=0
    _
  %s14 = ssub.s32 1, %s12
  %s15 = scalar_select 0, %s14, %s12
  %v16 = vstv %s10
  %17 = vst [vmem:[#allocation2] sm:$0x1] %v16
  $region1: #{tpu_custom_call.1} parent=0
    #allocation3 [shape = 'u8[4096]{0}', space=vmem, size = 0x1000, scoped, tag = 'input window, operand 0, single buffered']
    #allocation4 [shape = 's32[1]{0}', space=sflag, size = 0x4, scoped, tag = 'scoped memory for tpu_custom_call.1']
    #allocation5 [shape = 'u8[512]{0}', space=vmem, size = 0x400, scoped, tag = 'input window, operand 4, single buffered']
    #allocation6 [shape = 's32[1]{0}', space=sflag, size = 0x4, scoped, tag = 'scoped memory for tpu_custom_call.1']
    #allocation7 [shape = 'u8[16384]{0}', space=vmem, size = 0x4000, scoped, tag = 'input window, operand 7, single buffered']
    %18 = vsyncpa [#allocation4], 0
    %19 = vsyncpa [#allocation6], 0
    // Predicated region
    $region2: #{tpu_custom_call.1} parent=1 // pred_check
      _
    $region3: #{tpu_custom_call.1} parent=1 // pred_check_branch
      %21 = sbr.rel (0) target = $region5
    $region4: #{tpu_custom_call.1} parent=1 // pred_region
      %s23 = ssub.s32 128, 128
      %24 = vsyncadd [#allocation4], %s23
      %s26 = sshll.u32 [#allocation3], 4
      %s27 = int_to_ptr.vmem [resolvable:$true] %s26
      %29 = dma.hbm_to_vmem [thread:$0]  %s0, 128, %s27, [#allocation4]
    $region5: #{tpu_custom_call.1} parent=1 // pred_fallthru
      _
    // Predicated region
    $region6: #{tpu_custom_call.1} parent=1 // pred_check
      _
    $region7: #{tpu_custom_call.1} parent=1 // pred_check_branch
      %31 = sbr.rel (0) target = $region9
    $region8: #{tpu_custom_call.1} parent=1 // pred_region
      _
    $region9: #{tpu_custom_call.1} parent=1 // pred_fallthru
      _
    // Predicated region
    $region10: #{tpu_custom_call.1} parent=1 // pred_check
      _
    $region11: #{tpu_custom_call.1} parent=1 // pred_check_branch
      %33 = sbr.rel (0) target = $region13
    $region12: #{tpu_custom_call.1} parent=1 // pred_region
      _
    $region13: #{tpu_custom_call.1} parent=1 // pred_fallthru
      _
    // Predicated region
    $region14: #{tpu_custom_call.1} parent=1 // pred_check
      _
    $region15: #{tpu_custom_call.1} parent=1 // pred_check_branch
      %35 = sbr.rel (0) target = $region17
    $region16: #{tpu_custom_call.1} parent=1 // pred_region
      _
    $region17: #{tpu_custom_call.1} parent=1 // pred_fallthru
      _
    // Predicated region
    $region18: #{tpu_custom_call.1} parent=1 // pred_check
      _
    $region19: #{tpu_custom_call.1} parent=1 // pred_check_branch
      %37 = sbr.rel (0) target = $region21
    $region20: #{tpu_custom_call.1} parent=1 // pred_region
      %s39 = ssub.s32 16, 16
      %40 = vsyncadd [#allocation6], %s39
      %s42 = sshll.u32 [#allocation5], 4
      %s43 = int_to_ptr.vmem [resolvable:$true] %s42
      %45 = dma.hbm_to_vmem [thread:$0]  %s4, 16, %s43, [#allocation6]
    $region21: #{tpu_custom_call.1} parent=1 // pred_fallthru
      _
    // Predicated region
    $region22: #{tpu_custom_call.1} parent=1 // pred_check
      _
    $region23: #{tpu_custom_call.1} parent=1 // pred_check_branch
      %47 = sbr.rel (0) target = $region25
    $region24: #{tpu_custom_call.1} parent=1 // pred_region
      _
    $region25: #{tpu_custom_call.1} parent=1 // pred_fallthru
      _
    // Predicated region
    $region26: #{tpu_custom_call.1} parent=1 // pred_check
      _
    $region27: #{tpu_custom_call.1} parent=1 // pred_check_branch
      %49 = sbr.rel (0) target = $region29
    $region28: #{tpu_custom_call.1} parent=1 // pred_region
      _
    $region29: #{tpu_custom_call.1} parent=1 // pred_fallthru
      _
    // Predicated region
    $region30: #{tpu_custom_call.1} parent=1 // pred_check
      _
    $region31: #{tpu_custom_call.1} parent=1 // pred_check_branch
      %51 = sbr.rel (0) target = $region33
    $region32: #{tpu_custom_call.1} parent=1 // pred_region
      %s53 = ssub.s32 512, 512
      %54 = vsyncadd [#allocation6], %s53
      %s55 = sshll.u32 [#allocation7], 4
      %s56 = int_to_ptr.vmem [resolvable:$true] %s55
      %61 = dma.hbm_to_vmem [thread:$0]  %s7, 512, %s56, [#allocation6], 128, 128, 8
    $region33: #{tpu_custom_call.1} parent=1 // pred_fallthru
      _
    // Predicated region
    $region34: #{tpu_custom_call.1} parent=1 // pred_check
      _
    $region35: #{tpu_custom_call.1} parent=1 // pred_check_branch
      %63 = sbr.rel (0) target = $region37
    $region36: #{tpu_custom_call.1} parent=1 // pred_region
      _
    $region37: #{tpu_custom_call.1} parent=1 // pred_fallthru
      _
    // Predicated region
    $region38: #{tpu_custom_call.1} parent=1 // pred_check
      _
    $region39: #{tpu_custom_call.1} parent=1 // pred_check_branch
      %65 = sbr.rel (0) target = $region41
    $region40: #{tpu_custom_call.1} parent=1 // pred_region
      _
    $region41: #{tpu_custom_call.1} parent=1 // pred_fallthru
      _
    // Predicated region
    $region42: #{tpu_custom_call.1} parent=1 // pred_check
      _
    $region43: #{tpu_custom_call.1} parent=1 // pred_check_branch
      %67 = sbr.rel (0) target = $region45
    $region44: #{tpu_custom_call.1} parent=1 // pred_region
      _
    $region45: #{tpu_custom_call.1} parent=1 // pred_fallthru
      _
    // Predicated region
    $region46: #{tpu_custom_call.1} parent=1 // pred_check
      _
    $region47: #{tpu_custom_call.1} parent=1 // pred_check_branch
      %69 = sbr.rel (0) target = $region49
    $region48: #{tpu_custom_call.1} parent=1 // pred_region
      %70 = dma.done [#allocation4], 128
    $region49: #{tpu_custom_call.1} parent=1 // pred_fallthru
      _
    // Predicated region
    $region50: #{tpu_custom_call.1} parent=1 // pred_check
      _
    $region51: #{tpu_custom_call.1} parent=1 // pred_check_branch
      %72 = sbr.rel (0) target = $region53
    $region52: #{tpu_custom_call.1} parent=1 // pred_region
      %73 = dma.done [#allocation6], 16
    $region53: #{tpu_custom_call.1} parent=1 // pred_fallthru
      _
    // Predicated region
    $region54: #{tpu_custom_call.1} parent=1 // pred_check
      _
    $region55: #{tpu_custom_call.1} parent=1 // pred_check_branch
      %75 = sbr.rel (0) target = $region57
    $region56: #{tpu_custom_call.1} parent=1 // pred_region
      %76 = dma.done [#allocation6], 512
    $region57: #{tpu_custom_call.1} parent=1 // pred_fallthru
      _
    %v77 = vld [vmem:[#allocation3] sm:$0xff]
    %v78 = vld [vmem:[%s1] sm:$0xff]
    %v79 = vld [vmem:[%s2] sm:$0xff]
    %v80 = vld [vmem:[%s2 + $0x8] sm:$0xff]
    %v81 = vld [vmem:[%s3] sm:$0x1]
    %v83 = vlaneseq
    %v84 = vshrl.u32 %v83, 7
    %v85 = vsub.s32 0, %v84
    %v86 = vrot.slane %v81, %v85
    %vm88 = vcmask 130048
    %v90 = vsel %vm88, %v77, 0
    %92 = vmatprep.subr.mxu0 0.0
    %93 = vmatpush1.msra.mxu0 0.0
    %94 = vmatprep.subr.mxu0 0.0
    %95 = vmatpush1.msra.mxu0 0.0
    %96 = vmatprep.subr.mxu0 0.0
    %97 = vmatpush1.msra.mxu0 0.0
    %98 = vmatprep.subr.mxu0 0.0
    %99 = vmatpush1.msra.mxu0 0.0
    %100 = vmatprep.subr.mxu0 0.0
    %101 = vmatpush1.msra.mxu0 0.0
    %102 = vmatprep.subr.mxu0 0.0
    %103 = vmatpush1.msra.mxu0 0.0
    %104 = vmatprep.subr.mxu0 0.0
    %105 = vmatpush1.msra.mxu0 0.0
    %106 = vmatprep.subr.mxu0 0.0
    %107 = vmatpush1.msra.mxu0 0.0
    %108 = vmatprep.subr.mxu0 0.0
    %109 = vmatpush1.msra.mxu0 0.0
    %110 = vmatprep.subr.mxu0 0.0
    %111 = vmatpush1.msra.mxu0 0.0
    %112 = vmatprep.subr.mxu0 0.0
    %113 = vmatpush1.msra.mxu0 0.0
    %114 = vmatprep.subr.mxu0 0.0
    %115 = vmatpush1.msra.mxu0 0.0
    %116 = vmatprep.subr.mxu0 0.0
    %117 = vmatpush1.msra.mxu0 0.0
    %118 = vmatprep.subr.mxu0 0.0
    %119 = vmatpush1.msra.mxu0 0.0
    %120 = vmatprep.subr.mxu0 0.0
    %121 = vmatpush1.msra.mxu0 %v80
    %122 = vmatprep.subr.mxu0 0.0
    %123 = vmatpush1.msra.mxu0 %v79
    %124 = vmatprep.subr.mxu0 0.0
    %125 = vmatpush2.msra.mxu0 0.0
    %126 = vmatprep.subr.mxu0 0.0
    %127 = vmatpush2.msra.mxu0 0.0
    %128 = vmatprep.subr.mxu0 0.0
    %129 = vmatpush2.msra.mxu0 0.0
    %130 = vmatprep.subr.mxu0 0.0
    %131 = vmatpush2.msra.mxu0 0.0
    %132 = vmatprep.subr.mxu0 0.0
    %133 = vmatpush2.msra.mxu0 0.0
    %134 = vmatprep.subr.mxu0 0.0
    %135 = vmatpush2.msra.mxu0 0.0
    %136 = vmatprep.subr.mxu0 0.0
    %137 = vmatpush2.msra.mxu0 0.0
    %138 = vmatprep.subr.mxu0 0.0
    %139 = vmatpush2.msra.mxu0 0.0
    %140 = vmatprep.subr.mxu0 0.0
    %141 = vmatpush2.msra.mxu0 0.0
    %142 = vmatprep.subr.mxu0 0.0
    %143 = vmatpush2.msra.mxu0 0.0
    %144 = vmatprep.subr.mxu0 0.0
    %145 = vmatpush2.msra.mxu0 0.0
    %146 = vmatprep.subr.mxu0 0.0
    %147 = vmatpush2.msra.mxu0 0.0
    %148 = vmatprep.subr.mxu0 0.0
    %149 = vmatpush2.msra.mxu0 0.0
    %150 = vmatprep.subr.mxu0 0.0
    %151 = vmatpush2.msra.mxu0 0.0
    %152 = vmatprep.subr.mxu0 0.0
    %153 = vmatpush2.msra.mxu0 0.0
    %154 = vmatprep.subr.mxu0 0.0
    %155 = vmatpush2.msra.mxu0 0.0
    %156 = vmatprep.mubr.f32.mxu0 0.0
    %157 = vmatmul.mubr.f32.gmra.mxu0 %v90
    %v158 = vpop.f32.mrf.mxu0
    %v159 = vadd.f32 %v86, %v158
    %v160 = vpop.f32.mrf.mxu0
    %161 = vdwg.mxu0
    %vm162 = vcmp.ge.f32.partialorder %v159, 0.0
    %v163 = vmul.f32 %v159, 0.01
    %v164 = vsel %vm162, %v159, %v163
    %vm165 = vcmask 261120
    %v166 = vsel %vm165, %v164, 0.0
    %v167 = vrot.slane %v166, 4
    %v168 = vadd.f32 %v166, %v167
    %v169 = vrot.slane %v168, 2
    %v170 = vadd.f32 %v168, %v169
    %v171 = vrot.slane %v170, 1
    %v172 = vadd.f32 %v170, %v171
    %v173 = vmul.f32 %v172, 0.125
    %v174 = vmul.f32 %v164, %v164
    %v175 = vsel %vm165, %v174, 0.0
    %v176 = vrot.slane %v175, 4
    %v177 = vadd.f32 %v175, %v176
    %v178 = vrot.slane %v177, 2
    %v179 = vadd.f32 %v177, %v178
    %v180 = vrot.slane %v179, 1
    %v181 = vadd.f32 %v179, %v180
    %v182 = vmul.f32 %v181, 0.125
    %v183 = vmul.f32 %v173, %v173
    %v184 = vsub.f32 %v182, %v183
    %v185 = vld [vmem:[#allocation5] sm:$0x1]
    %v186 = vadd.f32 %v184, 1e-05
    %v187 = vrsqrt.pop %v186
    %v188 = vmul.f32 %v185, %v187
    %v189 = vld [vmem:[%s5] sm:$0x1]
    %v190 = vmul.f32 %v173, %v188
    %v191 = vsub.f32 %v189, %v190
    %v193 = vlaneseq
    %v194 = vshrl.u32 %v193, 7
    %v195 = vsub.s32 0, %v194
    %v196 = vrot.slane %v188, %v195
    %v198 = vmul.f32 %v164, %v196
    %v200 = vlaneseq
    %v201 = vshrl.u32 %v200, 7
    %v202 = vsub.s32 0, %v201
    %v203 = vrot.slane %v191, %v202
    %v205 = vadd.f32 %v198, %v203
    %v206 = vld [vmem:[#allocation7] sm:$0xff]
    %v207 = vld [vmem:[#allocation7 + $0x8] sm:$0xff]
    %v208 = vld [vmem:[#allocation7 + $0x10] sm:$0xff]
    %v209 = vld [vmem:[#allocation7 + $0x18] sm:$0xff]
    %v210 = vld [vmem:[%s6] sm:$0xf]
    %vm211 = vcmask 31744
    %v213 = vsel %vm211, %v78, 0
    %vm215 = vcmask 1043456
    %v217 = vsel %vm215, %v210, 0
    %219 = vmatprep.subr.mxu0 0.0
    %220 = vmatpush1.msra.mxu0 0.0
    %221 = vmatprep.subr.mxu0 0.0
    %222 = vmatpush1.msra.mxu0 0.0
    %223 = vmatprep.subr.mxu0 0.0
    %224 = vmatpush1.msra.mxu0 0.0
    %225 = vmatprep.subr.mxu0 0.0
    %226 = vmatpush1.msra.mxu0 0.0
    %227 = vmatprep.subr.mxu0 0.0
    %228 = vmatpush1.msra.mxu0 0.0
    %229 = vmatprep.subr.mxu0 0.0
    %230 = vmatpush1.msra.mxu0 0.0
    %231 = vmatprep.subr.mxu0 0.0
    %232 = vmatpush1.msra.mxu0 0.0
    %233 = vmatprep.subr.mxu0 0.0
    %234 = vmatpush1.msra.mxu0 0.0
    %235 = vmatprep.subr.mxu0 0.0
    %236 = vmatpush1.msra.mxu0 0.0
    %237 = vmatprep.subr.mxu0 0.0
    %238 = vmatpush1.msra.mxu0 0.0
    %239 = vmatprep.subr.mxu0 0.0
    %240 = vmatpush1.msra.mxu0 0.0
    %241 = vmatprep.subr.mxu0 0.0
    %242 = vmatpush1.msra.mxu0 0.0
    %243 = vmatprep.subr.mxu0 0.0
    %244 = vmatpush1.msra.mxu0 0.0
    %245 = vmatprep.subr.mxu0 0.0
    %246 = vmatpush1.msra.mxu0 0.0
    %247 = vmatprep.subr.mxu0 0.0
    %248 = vmatpush1.msra.mxu0 0.0
    %249 = vmatprep.subr.mxu0 0.0
    %250 = vmatpush1.msra.mxu0 %v217
    %251 = vmatprep.subr.mxu0 0.0
    %252 = vmatpush2.msra.mxu0 0.0
    %253 = vmatprep.subr.mxu0 0.0
    %254 = vmatpush2.msra.mxu0 0.0
    %255 = vmatprep.subr.mxu0 0.0
    %256 = vmatpush2.msra.mxu0 0.0
    %257 = vmatprep.subr.mxu0 0.0
    %258 = vmatpush2.msra.mxu0 0.0
    %259 = vmatprep.subr.mxu0 0.0
    %260 = vmatpush2.msra.mxu0 0.0
    %261 = vmatprep.subr.mxu0 0.0
    %262 = vmatpush2.msra.mxu0 0.0
    %263 = vmatprep.subr.mxu0 0.0
    %264 = vmatpush2.msra.mxu0 0.0
    %265 = vmatprep.subr.mxu0 0.0
    %266 = vmatpush2.msra.mxu0 0.0
    %267 = vmatprep.subr.mxu0 0.0
    %268 = vmatpush2.msra.mxu0 0.0
    %269 = vmatprep.subr.mxu0 0.0
    %270 = vmatpush2.msra.mxu0 0.0
    %271 = vmatprep.subr.mxu0 0.0
    %272 = vmatpush2.msra.mxu0 0.0
    %273 = vmatprep.subr.mxu0 0.0
    %274 = vmatpush2.msra.mxu0 0.0
    %275 = vmatprep.subr.mxu0 0.0
    %276 = vmatpush2.msra.mxu0 0.0
    %277 = vmatprep.subr.mxu0 0.0
    %278 = vmatpush2.msra.mxu0 0.0
    %279 = vmatprep.subr.mxu0 0.0
    %280 = vmatpush2.msra.mxu0 0.0
    %281 = vmatprep.subr.mxu0 0.0
    %282 = vmatpush2.msra.mxu0 0.0
    %283 = vmatprep.mubr.f32.mxu0 0.0
    %284 = vmatmul.mubr.f32.gmra.mxu0 %v213
    %v285 = vpop.f32.mrf.mxu0
    %v286 = vadd.f32 0.0, %v285
    %v287 = vpop.f32.mrf.mxu0
    %288 = vdwg.mxu0
    %v290 = vsel %vm165, %v205, 0
    %292 = vmatprep.subr.mxu0 0.0
    %293 = vmatpush1.msra.mxu0 0.0
    %294 = vmatprep.subr.mxu0 0.0
    %295 = vmatpush1.msra.mxu0 0.0
    %296 = vmatprep.subr.mxu0 0.0
    %297 = vmatpush1.msra.mxu0 0.0
    %298 = vmatprep.subr.mxu0 0.0
    %299 = vmatpush1.msra.mxu0 0.0
    %300 = vmatprep.subr.mxu0 0.0
    %301 = vmatpush1.msra.mxu0 0.0
    %302 = vmatprep.subr.mxu0 0.0
    %303 = vmatpush1.msra.mxu0 0.0
    %304 = vmatprep.subr.mxu0 0.0
    %305 = vmatpush1.msra.mxu0 0.0
    %306 = vmatprep.subr.mxu0 0.0
    %307 = vmatpush1.msra.mxu0 0.0
    %308 = vmatprep.subr.mxu0 0.0
    %309 = vmatpush1.msra.mxu0 0.0
    %310 = vmatprep.subr.mxu0 0.0
    %311 = vmatpush1.msra.mxu0 0.0
    %312 = vmatprep.subr.mxu0 0.0
    %313 = vmatpush1.msra.mxu0 0.0
    %314 = vmatprep.subr.mxu0 0.0
    %315 = vmatpush1.msra.mxu0 0.0
    %316 = vmatprep.subr.mxu0 0.0
    %317 = vmatpush1.msra.mxu0 %v209
    %318 = vmatprep.subr.mxu0 0.0
    %319 = vmatpush1.msra.mxu0 %v208
    %320 = vmatprep.subr.mxu0 0.0
    %321 = vmatpush1.msra.mxu0 %v207
    %322 = vmatprep.subr.mxu0 0.0
    %323 = vmatpush1.msra.mxu0 %v206
    %324 = vmatprep.subr.mxu0 0.0
    %325 = vmatpush2.msra.mxu0 0.0
    %326 = vmatprep.subr.mxu0 0.0
    %327 = vmatpush2.msra.mxu0 0.0
    %328 = vmatprep.subr.mxu0 0.0
    %329 = vmatpush2.msra.mxu0 0.0
    %330 = vmatprep.subr.mxu0 0.0
    %331 = vmatpush2.msra.mxu0 0.0
    %332 = vmatprep.subr.mxu0 0.0
    %333 = vmatpush2.msra.mxu0 0.0
    %334 = vmatprep.subr.mxu0 0.0
    %335 = vmatpush2.msra.mxu0 0.0
    %336 = vmatprep.subr.mxu0 0.0
    %337 = vmatpush2.msra.mxu0 0.0
    %338 = vmatprep.subr.mxu0 0.0
    %339 = vmatpush2.msra.mxu0 0.0
    %340 = vmatprep.subr.mxu0 0.0
    %341 = vmatpush2.msra.mxu0 0.0
    %342 = vmatprep.subr.mxu0 0.0
    %343 = vmatpush2.msra.mxu0 0.0
    %344 = vmatprep.subr.mxu0 0.0
    %345 = vmatpush2.msra.mxu0 0.0
    %346 = vmatprep.subr.mxu0 0.0
    %347 = vmatpush2.msra.mxu0 0.0
    %348 = vmatprep.subr.mxu0 0.0
    %349 = vmatpush2.msra.mxu0 0.0
    %350 = vmatprep.subr.mxu0 0.0
    %351 = vmatpush2.msra.mxu0 0.0
    %352 = vmatprep.subr.mxu0 0.0
    %353 = vmatpush2.msra.mxu0 0.0
    %354 = vmatprep.subr.mxu0 0.0
    %355 = vmatpush2.msra.mxu0 0.0
    %356 = vmatprep.mubr.f32.mxu0 0.0
    %357 = vmatmul.mubr.f32.gmra.mxu0 %v290
    %v358 = vpop.f32.mrf.mxu0
    %v359 = vadd.f32 %v286, %v358
    %v360 = vpop.f32.mrf.mxu0
    %361 = vdwg.mxu0
    %v362 = vld [vmem:[%s8] sm:$0x1]
    %v364 = vlaneseq
    %v365 = vshrl.u32 %v364, 7
    %v366 = vsub.s32 0, %v365
    %v367 = vrot.slane %v362, %v366
    %v369 = vadd.f32 %v359, %v367
    %vm370 = vcmp.ge.f32.partialorder %v369, 0.0
    %v371 = vmul.f32 %v369, 0.01
    %v372 = vsel %vm370, %v369, %v371
    %v373 = vld [vmem:[%s9] sm:$0x1]
    %v375 = vlaneseq
    %v376 = vshrl.u32 %v375, 7
    %v377 = vsub.s32 0, %v376
    %v378 = vrot.slane %v373, %v377
    %v380 = vmul.f32 %v372, %v378
    %v381 = vsel %vm165, %v380, 0.0
    %382 = vadd.xlane.f32.xlu0 %v381
    %v383 = vpop.xlane.xlu0 %382
    %v384 = vld [vmem:[#allocation2] sm:$0x1]
    %v386 = vlaneseq
    %v387 = vshrl.u32 %v386, 7
    %v388 = vsub.s32 0, %v387
    %v389 = vrot.slane %v384, %v388
    %v391 = vadd.f32 %v383, %v389
    %vm392 = vcmask 7168
    %393 = vst.msk [vmem:[%s11] sm:$0xff] %vm392, %v391
    // Predicated region
    $region58: #{tpu_custom_call.1} parent=1 // pred_check
      _
    $region59: #{tpu_custom_call.1} parent=1 // pred_check_branch
      %395 = sbr.rel (0) target = $region61
    $region60: #{tpu_custom_call.1} parent=1 // pred_region
      _
    $region61: #{tpu_custom_call.1} parent=1 // pred_fallthru
      _
    // Predicated region
    $region62: #{tpu_custom_call.1} parent=1 // pred_check
      _
    $region63: #{tpu_custom_call.1} parent=1 // pred_check_branch
      %397 = sbr.rel (0) target = $region65
    $region64: #{tpu_custom_call.1} parent=1 // pred_region
      _
    $region65: #{tpu_custom_call.1} parent=1 // pred_fallthru
      _
    %398 = vsyncpa [#allocation4], 1
    %399 = vsyncpa [#allocation6], 1

</llo_original>
